<compile_context>
chip_gen: v6e
topology: v6e:2x2x1
jax: 0.10.0
libtpu: 0.0.40
codegen_flags: <defaults>
</compile_context>

<pallas_src>
import functools

import jax
import jax.numpy as jnp
from jax.experimental import pallas as pl
from jax.experimental.pallas import tpu as pltpu


def _distill_kl_kernel(ys_ref, yt_ref, out_ref, *, inv_t, batch, block_rows):
    i = pl.program_id(0)

    # Scale by 1/T with a multiply (no per-element divide).
    ys = ys_ref[...].astype(jnp.float32) * inv_t   # student logits / T
    yt = yt_ref[...].astype(jnp.float32) * inv_t   # teacher logits / T

    # Student: only the (max-shifted) log-sum-exp is needed,
    # since log_p_s = ys_shift - lse_s.
    ys_shift = ys - jnp.max(ys, axis=1, keepdims=True)
    lse_s = jnp.log(jnp.sum(jnp.exp(ys_shift), axis=1, keepdims=True))

    # Teacher: unnormalized softmax pieces.
    yt_shift = yt - jnp.max(yt, axis=1, keepdims=True)
    e_t = jnp.exp(yt_shift)
    denom_t = jnp.sum(e_t, axis=1, keepdims=True)

    # sum_c p_t * (log p_t - log p_s)
    #   = (1/denom_t) * sum_c e_t * (yt_shift - ys_shift) + (lse_s - log denom_t)
    weighted = jnp.sum(e_t * (yt_shift - ys_shift), axis=1, keepdims=True)
    row_kl = weighted * pl.reciprocal(denom_t, approx=True) \
        + (lse_s - jnp.log(denom_t))                        # (TB, 1)

    # Mask rows past the true batch size (ragged last block).
    row_ids = i * block_rows + jax.lax.broadcasted_iota(
        jnp.int32, row_kl.shape, 0)
    row_kl = jnp.where(row_ids < batch, row_kl, 0.0)

    # Lane-dense partial-sum output block (one unmasked vreg store).
    block_sum = jnp.sum(row_kl, axis=0, keepdims=True)       # (1, 1)
    out_ref[...] = jnp.broadcast_to(block_sum, out_ref.shape)


def distill_kl(y_s, y_t, temperature, *, max_block_rows=1024,
               vmem_input_budget_bytes=8 * 1024 * 1024):
    """Pallas TPU implementation of DistillKL.forward. Returns a scalar f32."""
    assert y_s.shape == y_t.shape and y_s.ndim == 2, "expect 2-D logits (B, C)"
    batch, n_classes = y_s.shape
    itemsize = jnp.dtype(y_s.dtype).itemsize

    # Batch tile: 2 inputs x 2 pipeline buffers x (tb x C) stays inside the
    # input-buffer budget (leaves room for f32 intermediates under the scoped
    # VMEM limit on every generation, including v7x's smaller VMEM).
    bytes_per_row = 2 * 2 * n_classes * itemsize
    tb = max(1, vmem_input_budget_bytes // bytes_per_row)
    tb = min(tb, max_block_rows)
    if tb >= batch:
        tb = batch                      # single block: full-dim exception
    else:
        tb = max(8, (tb // 8) * 8)      # sublane alignment for partial blocks
    grid = pl.cdiv(batch, tb)

    kernel = functools.partial(
        _distill_kl_kernel,
        inv_t=1.0 / float(temperature),
        batch=batch,
        block_rows=tb,
    )

    partials = pl.pallas_call(
        kernel,
        grid=(grid,),
        out_shape=jax.ShapeDtypeStruct((grid * 8, 128), jnp.float32),
        in_specs=[
            pl.BlockSpec((tb, n_classes), lambda i: (i, 0)),
            pl.BlockSpec((tb, n_classes), lambda i: (i, 0)),
        ],
        out_specs=pl.BlockSpec((8, 128), lambda i: (i, 0)),
        compiler_params=pltpu.CompilerParams(
            dimension_semantics=("parallel",),
            vmem_limit_bytes=48 * 1024 * 1024,
        ),
    )(y_s, y_t)

    t = jnp.float32(temperature)
    per_block = partials.reshape(grid, 8, 128)[:, 0, 0]      # one value per block
    return jnp.sum(per_block) * (t * t) / jnp.float32(batch)


def _distill_kl_ref(y_s, y_t, temperature):
    """Pure-JAX reference (mirrors the PyTorch math) for a sanity check."""
    T = float(temperature)
    log_p_s = jax.nn.log_softmax(y_s.astype(jnp.float32) / T, axis=1)
    p_t = jax.nn.softmax(y_t.astype(jnp.float32) / T, axis=1)
    log_p_t = jax.nn.log_softmax(y_t.astype(jnp.float32) / T, axis=1)
    kl = jnp.sum(p_t * (log_p_t - log_p_s))
    return kl * (T * T) / y_s.shape[0]


if __name__ == "__main__":
    key = jax.random.PRNGKey(0)
    k1, k2 = jax.random.split(key)

    # Small, CIFAR-100-style logits.  B=36 with a 16-row tile exercises the
    # multi-step grid and the ragged-last-block mask; C=100 exercises the
    # full-dim (non-128-multiple) class block.
    B, C = 36, 100
    T = 4.0   # distillation temperature (module hyperparameter)

    y_s = jax.random.normal(k1, (B, C), dtype=jnp.float32)
    y_t = jax.random.normal(k2, (B, C), dtype=jnp.float32)

    loss = jax.block_until_ready(distill_kl(y_s, y_t, T, max_block_rows=16))
    ref = jax.block_until_ready(_distill_kl_ref(y_s, y_t, T))

    assert jnp.isfinite(loss), "non-finite loss"
    # approx EUP reciprocal + different summation order => allow ~1e-3 slack.
    tol = 1e-3 * max(1.0, abs(float(ref)))
    assert abs(float(loss) - float(ref)) < tol, (float(loss), float(ref))

    # bf16 inputs (halved HBM traffic) — smoke check against the f32 result.
    loss_bf16 = jax.block_until_ready(
        distill_kl(y_s.astype(jnp.bfloat16), y_t.astype(jnp.bfloat16), T,
                   max_block_rows=16))
    assert jnp.isfinite(loss_bf16), "non-finite bf16 loss"
    assert abs(float(loss_bf16) - float(loss)) < 5e-2 * max(1.0, abs(float(loss)))

    print("KERNEL_OK")
</pallas_src>

<mosaic_0001>
module attributes {stable_mosaic.version = 11 : i64} {
  func.func @_distill_kl_kernel(%arg0: i32, %arg1: memref<16x100xf32, #tpu.memory_space<vmem>>, %arg2: memref<16x100xf32, #tpu.memory_space<vmem>>, %arg3: memref<8x128xf32, #tpu.memory_space<vmem>>) attributes {dimension_semantics = [#tpu.dimension_semantics<parallel>], iteration_bounds = array<i64: 3>, scalar_prefetch = 0 : i64, scratch_operands = 0 : i64, tpu.core_type = #tpu.core_type<tc>, window_params = [{transform_indices = @transform_0, window_bounds = array<i64: 16, 100>}, {transform_indices = @transform_1, window_bounds = array<i64: 16, 100>}, {transform_indices = @transform_2, window_bounds = array<i64: 8, 128>}]} {
    %c0 = arith.constant 0 : index
    %c0_0 = arith.constant 0 : index
    %0 = vector.load %arg1[%c0, %c0_0] : memref<16x100xf32, #tpu.memory_space<vmem>>, vector<16x100xf32>
    %cst = arith.constant 2.500000e-01 : f32
    %1 = vector.broadcast %cst : f32 to vector<16x100xf32>
    %2 = arith.mulf %0, %1 : vector<16x100xf32>
    %c0_1 = arith.constant 0 : index
    %c0_2 = arith.constant 0 : index
    %3 = vector.load %arg2[%c0_1, %c0_2] : memref<16x100xf32, #tpu.memory_space<vmem>>, vector<16x100xf32>
    %cst_3 = arith.constant 2.500000e-01 : f32
    %4 = vector.broadcast %cst_3 : f32 to vector<16x100xf32>
    %5 = arith.mulf %3, %4 : vector<16x100xf32>
    %cst_4 = arith.constant dense<0xFF800000> : vector<16xf32>
    %6 = vector.multi_reduction <maximumf>, %2, %cst_4 [1] : vector<16x100xf32> to vector<16xf32>
    %7 = vector.shape_cast %6 : vector<16xf32> to vector<16x1xf32>
    %8 = vector.broadcast %7 : vector<16x1xf32> to vector<16x100xf32>
    %9 = arith.subf %2, %8 : vector<16x100xf32>
    %10 = math.exp %9 : vector<16x100xf32>
    %cst_5 = arith.constant dense<0.000000e+00> : vector<16xf32>
    %11 = vector.multi_reduction <add>, %10, %cst_5 [1] : vector<16x100xf32> to vector<16xf32>
    %12 = vector.shape_cast %11 : vector<16xf32> to vector<16x1xf32>
    %13 = math.log %12 : vector<16x1xf32>
    %cst_6 = arith.constant dense<0xFF800000> : vector<16xf32>
    %14 = vector.multi_reduction <maximumf>, %5, %cst_6 [1] : vector<16x100xf32> to vector<16xf32>
    %15 = vector.shape_cast %14 : vector<16xf32> to vector<16x1xf32>
    %16 = vector.broadcast %15 : vector<16x1xf32> to vector<16x100xf32>
    %17 = arith.subf %5, %16 : vector<16x100xf32>
    %18 = math.exp %17 : vector<16x100xf32>
    %cst_7 = arith.constant dense<0.000000e+00> : vector<16xf32>
    %19 = vector.multi_reduction <add>, %18, %cst_7 [1] : vector<16x100xf32> to vector<16xf32>
    %20 = vector.shape_cast %19 : vector<16xf32> to vector<16x1xf32>
    %21 = arith.subf %17, %9 : vector<16x100xf32>
    %22 = arith.mulf %18, %21 : vector<16x100xf32>
    %cst_8 = arith.constant dense<0.000000e+00> : vector<16xf32>
    %23 = vector.multi_reduction <add>, %22, %cst_8 [1] : vector<16x100xf32> to vector<16xf32>
    %24 = vector.shape_cast %23 : vector<16xf32> to vector<16x1xf32>
    %25 = tpu.reciprocal %20 {approx = true} : vector<16x1xf32> -> vector<16x1xf32>
    %26 = arith.mulf %24, %25 : vector<16x1xf32>
    %27 = math.log %20 : vector<16x1xf32>
    %28 = arith.subf %13, %27 : vector<16x1xf32>
    %29 = arith.addf %26, %28 : vector<16x1xf32>
    %c16_i32 = arith.constant 16 : i32
    %30 = arith.muli %arg0, %c16_i32 : i32
    %31 = tpu.iota {dimensions = array<i32: 0>} : vector<16x1xi32>
    %32 = vector.broadcast %30 : i32 to vector<16x1xi32>
    %33 = arith.addi %32, %31 : vector<16x1xi32>
    %c36_i32 = arith.constant 36 : i32
    %34 = vector.broadcast %c36_i32 : i32 to vector<16x1xi32>
    %35 = arith.cmpi slt, %33, %34 : vector<16x1xi32>
    %cst_9 = arith.constant 0.000000e+00 : f32
    %36 = vector.broadcast %cst_9 : f32 to vector<16x1xf32>
    %37 = arith.select %35, %29, %36 : vector<16x1xi1>, vector<16x1xf32>
    %cst_10 = arith.constant dense<0.000000e+00> : vector<1xf32>
    %38 = vector.multi_reduction <add>, %37, %cst_10 [0] : vector<16x1xf32> to vector<1xf32>
    %39 = vector.shape_cast %38 : vector<1xf32> to vector<1x1xf32>
    %40 = vector.shape_cast %39 : vector<1x1xf32> to vector<1x1xf32>
    %41 = vector.broadcast %40 : vector<1x1xf32> to vector<8x128xf32>
    %c0_11 = arith.constant 0 : index
    %c0_12 = arith.constant 0 : index
    %42 = vector.load %arg3[%c0_11, %c0_12] : memref<8x128xf32, #tpu.memory_space<vmem>>, vector<8x128xf32>
    tpu.vector_store %arg3[%c0_11, %c0_12], %41 {strides = array<i32>} : memref<8x128xf32, #tpu.memory_space<vmem>>, vector<8x128xf32>,
    return
  }
  func.func @transform_0(%arg0: i32) -> (i32, i32) {
    %c0_i32 = arith.constant 0 : i32
    %c0_i32_0 = arith.constant 0 : i32
    return %arg0, %c0_i32 : i32, i32
  }
  func.func @transform_1(%arg0: i32) -> (i32, i32) {
    %c0_i32 = arith.constant 0 : i32
    %c0_i32_0 = arith.constant 0 : i32
    return %arg0, %c0_i32 : i32, i32
  }
  func.func @transform_2(%arg0: i32) -> (i32, i32) {
    %c0_i32 = arith.constant 0 : i32
    %c0_i32_0 = arith.constant 0 : i32
    return %arg0, %c0_i32 : i32, i32
  }
}

</mosaic_0001>

<llo_original>
// kernel: tpu_custom_call.1
$region0: #{tpu_custom_call.1}
  #allocation0 [shape = 'u32[]', space=smem, size = 0x4, offset = 0x4, fixed_abs, tag = 'smem constant byte address 0x4 - core index']
  #allocation1 [shape = 'u32[144,128]{1,0:T(1,128)}', space=vmem, size = 0x12000, scoped, tag = 'internal scratch']
  %s0 = inlined_call_operand.hbm [shape: f32[36,100], index: 0, kind: input, shape index: {}]
  %s1 = inlined_call_operand.hbm [shape: f32[36,100], index: 1, kind: input, shape index: {}]
  %s2 = inlined_call_operand.hbm [shape: f32[24,128], index: 2, kind: output, shape index: {}]
  %s3 = sld [smem:[#allocation0]]
  $region49: #{tpu_custom_call.1} parent=0
    _
  %s5 = ssub.s32 1, %s3
  %s6 = scalar_select 0, %s5, %s3
  $region1: #{tpu_custom_call.1} parent=0
    #allocation2 [shape = 'u8[16384]{0}', space=vmem, size = 0x4000, scoped, tag = 'input window, operand 0']
    #allocation3 [shape = 's32[2]{0}', space=sflag, size = 0x8, scoped, tag = 'scoped memory for tpu_custom_call.1']
    #allocation4 [shape = 's32[2]{0}', space=sflag, size = 0x8, scoped, tag = 'scoped memory for tpu_custom_call.1']
    #allocation5 [shape = 'u8[16384]{0}', space=vmem, size = 0x4000, scoped, tag = 'input window, operand 1']
    #allocation6 [shape = 's32[2]{0}', space=sflag, size = 0x8, scoped, tag = 'scoped memory for tpu_custom_call.1']
    #allocation7 [shape = 'u8[8192]{0}', space=vmem, size = 0x2000, scoped, tag = 'output window, operand 0']
    %7 = vsyncpa [#allocation3], 0
    %s8 = scalar_lea.sflag [#allocation3], 1
    %9 = vsyncpa %s8, 0
    %10 = vsyncpa [#allocation6], 0
    %s11 = scalar_lea.sflag [#allocation6], 1
    %12 = vsyncpa %s11, 0
    %13 = vsyncpa [#allocation4], 0
    %s14 = scalar_lea.sflag [#allocation4], 1
    %15 = vsyncpa %s14, 0
    loop: start=0, step=1, limit=5
    $region2: #{tpu_custom_call.1} parent=1 // loop_pre_header
      _
    $region3: #{tpu_custom_call.1} parent=1 // loop_header
      %s17 = sphi 0, %s21
      %p18 = scmp.ge.s32.totalorder %s17, 5
      %s27 = sphi 0, %s29
      %s30 = sphi 0, %s27
      %s31 = sphi 0, %s30
      %s47 = sphi 0, %s31
      %s53 = sphi 0, %s55
      %s56 = sphi 0, %s53
      %s57 = sphi 0, %s56
      %s73 = sphi 0, %s57
      %s79 = sphi 0, %s81
      %s82 = sphi 0, %s79
      %s83 = sphi 0, %s82
      %s99 = sphi 0, %s83
    $region4: #{tpu_custom_call.1} parent=1 // loop_header_branch
      %20 = sbr.rel (%p18) target = $region8
    $region5: #{tpu_custom_call.1} parent=1 // loop_body
      %s22 = ssub.s32 %s17, 1
      %s23 = ssub.s32 %s17, 2
      %s24 = sadd.s32 %s17, 1
      %s25 = ssub.s32 %s17, %s24
      %p26 = scmp.eq.s32.totalorder %s25, 0
      %s28 = sadd.s32 %s27, 1
      %s29 = scalar_select %p26, %s27, %s28
      %p32 = pneg %p26
      %p33 = scmp.eq.s32.totalorder %s17, 2
      %p34 = por %p32, %p33
      %p35 = scmp.ne.s32.totalorder %s27, %s30
      %p36 = scmp.eq.s32.totalorder %s17, 0
      %p37 = por %p35, %p36
      %p38 = scmp.ne.s32.totalorder %s27, %s30
      %p39 = scmp.eq.s32.totalorder %s22, 2
      %p40 = por %p38, %p39
      %p41 = scmp.ne.s32.totalorder %s30, %s31
      %p42 = scmp.eq.s32.totalorder %s22, 0
      %p43 = por %p41, %p42
      %p44 = scmp.ne.s32.totalorder %s30, %s31
      %p45 = scmp.eq.s32.totalorder %s23, 2
      %p46 = por %p44, %p45
      %p48 = scmp.ne.s32.totalorder %s31, %s47
      %p49 = scmp.eq.s32.totalorder %s23, 0
      %p50 = por %p48, %p49
      %s51 = ssub.s32 %s17, %s24
      %p52 = scmp.eq.s32.totalorder %s51, 0
      %s54 = sadd.s32 %s53, 1
      %s55 = scalar_select %p52, %s53, %s54
      %p58 = pneg %p52
      %p59 = scmp.eq.s32.totalorder %s17, 2
      %p60 = por %p58, %p59
      %p61 = scmp.ne.s32.totalorder %s53, %s56
      %p62 = scmp.eq.s32.totalorder %s17, 0
      %p63 = por %p61, %p62
      %p64 = scmp.ne.s32.totalorder %s53, %s56
      %p65 = scmp.eq.s32.totalorder %s22, 2
      %p66 = por %p64, %p65
      %p67 = scmp.ne.s32.totalorder %s56, %s57
      %p68 = scmp.eq.s32.totalorder %s22, 0
      %p69 = por %p67, %p68
      %p70 = scmp.ne.s32.totalorder %s56, %s57
      %p71 = scmp.eq.s32.totalorder %s23, 2
      %p72 = por %p70, %p71
      %p74 = scmp.ne.s32.totalorder %s57, %s73
      %p75 = scmp.eq.s32.totalorder %s23, 0
      %p76 = por %p74, %p75
      %s77 = ssub.s32 %s17, %s24
      %p78 = scmp.eq.s32.totalorder %s77, 0
      %s80 = sadd.s32 %s79, 1
      %s81 = scalar_select %p78, %s79, %s80
      %p84 = pneg %p78
      %p85 = scmp.eq.s32.totalorder %s17, 2
      %p86 = por %p84, %p85
      %p87 = scmp.ne.s32.totalorder %s79, %s82
      %p88 = scmp.eq.s32.totalorder %s17, 0
      %p89 = por %p87, %p88
      %p90 = scmp.ne.s32.totalorder %s79, %s82
      %p91 = scmp.eq.s32.totalorder %s22, 2
      %p92 = por %p90, %p91
      %p93 = scmp.ne.s32.totalorder %s82, %s83
      %p94 = scmp.eq.s32.totalorder %s22, 0
      %p95 = por %p93, %p94
      %p96 = scmp.ne.s32.totalorder %s82, %s83
      %p97 = scmp.eq.s32.totalorder %s23, 2
      %p98 = por %p96, %p97
      %p100 = scmp.ne.s32.totalorder %s83, %s99
      %p101 = scmp.eq.s32.totalorder %s23, 0
      %p102 = por %p100, %p101
      %p103 = scmp.le.s32.totalorder 1, %s17
      %p104 = scmp.lt.s32.totalorder %s17, 4
      %p105 = pnand %p103, %p104
      %p106 = pneg %p105
      // Predicated region
      $region9: #{tpu_custom_call.1} parent=5 // pred_check
        _
      $region10: #{tpu_custom_call.1} parent=5 // pred_check_branch
        %108 = sbr.rel (%p105) target = $region12
      $region11: #{tpu_custom_call.1} parent=5 // pred_region
        %s109 = ssub.s32 %s17, 1
      $region12: #{tpu_custom_call.1} parent=5 // pred_fallthru
        _
      %p110 = scmp.lt.s32.totalorder %s17, 3
      // Predicated region
      $region13: #{tpu_custom_call.1} parent=5 // pred_check
        %p111 = pneg %p110
      $region14: #{tpu_custom_call.1} parent=5 // pred_check_branch
        %113 = sbr.rel (%p111) target = $region16
      $region15: #{tpu_custom_call.1} parent=5 // pred_region
        // Predicated region
        $region17: #{tpu_custom_call.1} parent=15 // pred_check
          %p114 = pneg %p37
        $region18: #{tpu_custom_call.1} parent=15 // pred_check_branch
          %116 = sbr.rel (%p114) target = $region20
        $region19: #{tpu_custom_call.1} parent=15 // pred_region
          %s117 = sand.u32 %s27, 1
          %s118 = scalar_lea.sflag [#allocation3], %s117
          %s119 = sand.u32 %s27, 1
          %s120 = smul.addr %s119, 16
          %s121 = scalar_lea.vmem [#allocation2], %s120
          %s122 = smul.u32 2, %s17
          %s123 = ssub.s32 5, %s122
          %p124 = scmp.lt.s32.totalorder %s123, 2
          %s125 = scalar_select %p124, %s123, 2
          %s126 = smul.u32 128, %s125
          %s128 = ssub.s32 256, %s126
          %129 = vsyncadd %s118, %s128
          %p130 = scmp.ne.s32.totalorder 0, %s126
          %s131 = smul.addr %s122, 128
          %s132 = scalar_lea.hbm %s0, %s131
          %s133 = smul.u32 8, %s125
          %s134 = sshll.u32 %s121, 4
          %s135 = int_to_ptr.vmem [resolvable:$true] %s134
          %s136 = sshll.u32 %s133, 4
          %140 = dma.hbm_to_vmem [thread:$0]  (%p130), %s132, %s136, %s135, %s118, 128, 128, 8
        $region20: #{tpu_custom_call.1} parent=15 // pred_fallthru
          _
        // Predicated region
        $region21: #{tpu_custom_call.1} parent=15 // pred_check
          %p141 = pneg %p63
        $region22: #{tpu_custom_call.1} parent=15 // pred_check_branch
          %143 = sbr.rel (%p141) target = $region24
        $region23: #{tpu_custom_call.1} parent=15 // pred_region
          %s144 = sand.u32 %s53, 1
          %s145 = scalar_lea.sflag [#allocation6], %s144
          %s146 = sand.u32 %s53, 1
          %s147 = smul.addr %s146, 16
          %s148 = scalar_lea.vmem [#allocation5], %s147
          %s149 = smul.u32 2, %s17
          %s150 = ssub.s32 5, %s149
          %p151 = scmp.lt.s32.totalorder %s150, 2
          %s152 = scalar_select %p151, %s150, 2
          %s153 = smul.u32 128, %s152
          %s155 = ssub.s32 256, %s153
          %156 = vsyncadd %s145, %s155
          %p157 = scmp.ne.s32.totalorder 0, %s153
          %s158 = smul.addr %s149, 128
          %s159 = scalar_lea.hbm %s1, %s158
          %s160 = smul.u32 8, %s152
          %s161 = sshll.u32 %s148, 4
          %s162 = int_to_ptr.vmem [resolvable:$true] %s161
          %s163 = sshll.u32 %s160, 4
          %167 = dma.hbm_to_vmem [thread:$0]  (%p157), %s159, %s163, %s162, %s145, 128, 128, 8
        $region24: #{tpu_custom_call.1} parent=15 // pred_fallthru
          _
      $region16: #{tpu_custom_call.1} parent=5 // pred_fallthru
        _
      %p168 = scmp.le.s32.totalorder 1, %s17
      %p169 = scmp.lt.s32.totalorder %s17, 4
      %p170 = pnand %p168, %p169
      %p171 = pneg %p170
      // Predicated region
      $region25: #{tpu_custom_call.1} parent=5 // pred_check
        _
      $region26: #{tpu_custom_call.1} parent=5 // pred_check_branch
        %173 = sbr.rel (%p170) target = $region28
      $region27: #{tpu_custom_call.1} parent=5 // pred_region
        %s174 = ssub.s32 %s17, 1
        %s175 = sand.u32 %s30, 1
        %s176 = scalar_lea.sflag [#allocation3], %s175
        %s177 = sand.u32 %s30, 1
        %s178 = smul.addr %s177, 16
        %s179 = scalar_lea.vmem [#allocation2], %s178
        // Predicated region
        $region29: #{tpu_custom_call.1} parent=27 // pred_check
          %p180 = pneg %p43
        $region30: #{tpu_custom_call.1} parent=27 // pred_check_branch
          %182 = sbr.rel (%p180) target = $region32
        $region31: #{tpu_custom_call.1} parent=27 // pred_region
          %183 = dma.done %s176, 256
        $region32: #{tpu_custom_call.1} parent=27 // pred_fallthru
          _
        %s184 = sand.u32 %s56, 1
        %s185 = scalar_lea.sflag [#allocation6], %s184
        %s186 = sand.u32 %s56, 1
        %s187 = smul.addr %s186, 16
        %s188 = scalar_lea.vmem [#allocation5], %s187
        // Predicated region
        $region33: #{tpu_custom_call.1} parent=27 // pred_check
          %p189 = pneg %p69
        $region34: #{tpu_custom_call.1} parent=27 // pred_check_branch
          %191 = sbr.rel (%p189) target = $region36
        $region35: #{tpu_custom_call.1} parent=27 // pred_region
          %192 = dma.done %s185, 256
        $region36: #{tpu_custom_call.1} parent=27 // pred_fallthru
          _
        %s193 = sand.u32 %s30, 1
        %s194 = scalar_lea.sflag [#allocation3], %s193
        %s195 = sand.u32 %s30, 1
        %s196 = smul.addr %s195, 16
        %s197 = scalar_lea.vmem [#allocation2], %s196
        %p198 = pneg %p43
        %p199 = pneg %p40
        %s200 = sand.u32 %s56, 1
        %s201 = scalar_lea.sflag [#allocation6], %s200
        %s202 = sand.u32 %s56, 1
        %s203 = smul.addr %s202, 16
        %s204 = scalar_lea.vmem [#allocation5], %s203
        %p205 = pneg %p69
        %p206 = pneg %p66
        %p207 = pneg %p95
        %p208 = pneg %p92
        %s209 = sand.u32 %s82, 1
        %s210 = scalar_lea.sflag [#allocation4], %s209
        %s211 = sand.u32 %s82, 1
        %s212 = smul.addr %s211, 8
        %s213 = scalar_lea.vmem [#allocation7], %s212
        %s214 = smul.u32 2, %s22
        %s215 = ssub.s32 5, %s214
        %p216 = scmp.lt.s32.totalorder %s215, 2
        %s217 = scalar_select %p216, %s215, 2
        %s218 = smul.u32 128, %s217
        %s219 = smul.u32 2, %s22
        %s220 = ssub.s32 5, %s219
        %p221 = scmp.lt.s32.totalorder %s220, 2
        %s222 = scalar_select %p221, %s220, 2
        %s223 = smul.u32 128, %s222
        %v224 = vld [vmem:[%s179] sm:$0xff]
        %v225 = vld [vmem:[%s179 + $0x8] sm:$0xff]
        %v226 = vmul.f32 %v224, 0.25
        %v227 = vmul.f32 %v225, 0.25
        %v228 = vld [vmem:[%s188] sm:$0xff]
        %v229 = vld [vmem:[%s188 + $0x8] sm:$0xff]
        %v230 = vmul.f32 %v228, 0.25
        %v231 = vmul.f32 %v229, 0.25
        %vm232 = vcmask 818176
        %v233 = vsel %vm232, %v226, -inf
        %234 = vmax.xlane.f32.xlu0 %v233
        %v235 = vpop.xlane.xlu0 %234
        %v236 = vsel %vm232, %v227, -inf
        %237 = vmax.xlane.f32.xlu0 %v236
        %v238 = vpop.xlane.xlu0 %237
        %v239 = vsub.f32 %v226, %v235
        %v240 = vsub.f32 %v227, %v238
        %v241 = vmul.f32 %v239, 1.442695
        %v242 = vpow.pop %v241
        %v243 = vmul.f32 %v240, 1.442695
        %v244 = vpow.pop %v243
        %v245 = vsel %vm232, %v242, 0.0
        %246 = vadd.xlane.f32.xlu0 %v245
        %v247 = vpop.xlane.xlu0 %246
        %v248 = vsel %vm232, %v244, 0.0
        %249 = vadd.xlane.f32.xlu0 %v248
        %v250 = vpop.xlane.xlu0 %249
        %v251 = vlog2.pop %v247
        %v252 = vmul.f32 %v251, 0.6931472
        %v253 = vlog2.pop %v250
        %v254 = vmul.f32 %v253, 0.6931472
        %v255 = vsel %vm232, %v230, -inf
        %256 = vmax.xlane.f32.xlu0 %v255
        %v257 = vpop.xlane.xlu0 %256
        %v258 = vsel %vm232, %v231, -inf
        %259 = vmax.xlane.f32.xlu0 %v258
        %v260 = vpop.xlane.xlu0 %259
        %v261 = vsub.f32 %v230, %v257
        %v262 = vsub.f32 %v231, %v260
        %v263 = vmul.f32 %v261, 1.442695
        %v264 = vpow.pop %v263
        %v265 = vmul.f32 %v262, 1.442695
        %v266 = vpow.pop %v265
        %v267 = vsel %vm232, %v264, 0.0
        %268 = vadd.xlane.f32.xlu0 %v267
        %v269 = vpop.xlane.xlu0 %268
        %v270 = vsel %vm232, %v266, 0.0
        %271 = vadd.xlane.f32.xlu0 %v270
        %v272 = vpop.xlane.xlu0 %271
        %v273 = vsub.f32 %v261, %v239
        %v274 = vsub.f32 %v262, %v240
        %v275 = vmul.f32 %v264, %v273
        %v276 = vmul.f32 %v266, %v274
        %v277 = vsel %vm232, %v275, 0.0
        %278 = vadd.xlane.f32.xlu0 %v277
        %v279 = vpop.xlane.xlu0 %278
        %v280 = vsel %vm232, %v276, 0.0
        %281 = vadd.xlane.f32.xlu0 %v280
        %v282 = vpop.xlane.xlu0 %281
        %v283 = vrcp.pop %v269
        %v284 = vrcp.pop %v272
        %v285 = vmul.f32 %v279, %v283
        %v286 = vmul.f32 %v282, %v284
        %v287 = vlog2.pop %v269
        %v288 = vmul.f32 %v287, 0.6931472
        %v289 = vlog2.pop %v272
        %v290 = vmul.f32 %v289, 0.6931472
        %v291 = vsub.f32 %v252, %v288
        %v292 = vsub.f32 %v254, %v290
        %v293 = vadd.f32 %v285, %v291
        %v294 = vadd.f32 %v286, %v292
        %s295 = smul.u32 %s22, 16
        %v296 = vlaneseq
        %v297 = vshrl.u32 %v296, 7
        %v298 = vadd.s32 %v297, 8
        %v299 = vstv %s295
        %v300 = vadd.s32 %v299, %v297
        %v301 = vadd.s32 %v299, %v298
        %vm302 = vcmp.lt.s32.totalorder %v300, 36
        %vm303 = vcmp.lt.s32.totalorder %v301, 36
        %v304 = vsel %vm302, %v293, 0.0
        %v305 = vsel %vm303, %v294, 0.0
        %v306 = vadd.f32 %v304, %v305
        %v307 = vrot.slane %v306, 4
        %v308 = vadd.f32 %v306, %v307
        %v309 = vrot.slane %v308, 2
        %v310 = vadd.f32 %v308, %v309
        %v311 = vrot.slane %v310, 1
        %v312 = vadd.f32 %v310, %v311
        %313 = vst [vmem:[%s213] sm:$0xff] %v312
        %s314 = sand.u32 %s82, 1
        %s315 = scalar_lea.sflag [#allocation4], %s314
        %s316 = sand.u32 %s82, 1
        %s317 = smul.addr %s316, 8
        %s318 = scalar_lea.vmem [#allocation7], %s317
        // Predicated region
        $region37: #{tpu_custom_call.1} parent=27 // pred_check
          %p319 = pneg %p92
        $region38: #{tpu_custom_call.1} parent=27 // pred_check_branch
          %321 = sbr.rel (%p319) target = $region40
        $region39: #{tpu_custom_call.1} parent=27 // pred_region
          %s323 = ssub.s32 128, 128
          %324 = vsyncadd %s315, %s323
          %s325 = smul.addr %s22, 128
          %s326 = scalar_lea.hbm %s2, %s325
          %s328 = sshll.u32 %s318, 4
          %s329 = int_to_ptr.vmem [resolvable:$true] %s328
          %331 = dma.vmem_to_hbm [thread:$0]  %s329, 128, %s326, %s315
        $region40: #{tpu_custom_call.1} parent=27 // pred_fallthru
          _
      $region28: #{tpu_custom_call.1} parent=5 // pred_fallthru
        _
      %p332 = scmp.le.s32.totalorder 2, %s17
      // Predicated region
      $region41: #{tpu_custom_call.1} parent=5 // pred_check
        %p333 = pneg %p332
      $region42: #{tpu_custom_call.1} parent=5 // pred_check_branch
        %335 = sbr.rel (%p333) target = $region44
      $region43: #{tpu_custom_call.1} parent=5 // pred_region
        %s336 = ssub.s32 %s17, 2
        // Predicated region
        $region45: #{tpu_custom_call.1} parent=43 // pred_check
          %p337 = pneg %p98
        $region46: #{tpu_custom_call.1} parent=43 // pred_check_branch
          %339 = sbr.rel (%p337) target = $region48
        $region47: #{tpu_custom_call.1} parent=43 // pred_region
          %s340 = sand.u32 %s83, 1
          %s341 = scalar_lea.sflag [#allocation4], %s340
          %s342 = sand.u32 %s83, 1
          %s343 = smul.addr %s342, 8
          %s344 = scalar_lea.vmem [#allocation7], %s343
          %345 = dma.done %s341, 128
        $region48: #{tpu_custom_call.1} parent=43 // pred_fallthru
          _
      $region44: #{tpu_custom_call.1} parent=5 // pred_fallthru
        _
    $region6: #{tpu_custom_call.1} parent=1 // loop_footer
      %s21 = sadd.s32 1, %s17
    $region7: #{tpu_custom_call.1} parent=1 // loop_footer_branch
      %16 = sbr.rel target = $region3
    $region8: #{tpu_custom_call.1} parent=1 // loop_exit
      _
    %346 = vsyncpa [#allocation3], 1
    %s347 = scalar_lea.sflag [#allocation3], 1
    %348 = vsyncpa %s347, 1
    %349 = vsyncpa [#allocation6], 1
    %s350 = scalar_lea.sflag [#allocation6], 1
    %351 = vsyncpa %s350, 1
    %352 = vsyncpa [#allocation4], 1
    %s353 = scalar_lea.sflag [#allocation4], 1
    %354 = vsyncpa %s353, 1

</llo_original>
